<compile_context>
chip_gen: v6e
topology: v6e:2x2x1
jax: 0.10.0
libtpu: 0.0.40
codegen_flags: <defaults>
</compile_context>

<pallas_src>
import functools

import jax
import jax.numpy as jnp
from jax.experimental import pallas as pl
from jax.experimental.pallas import tpu as pltpu


def _scale_kernel(x_ref, s_ref, o_ref):
    # Elementwise multiply; scale block broadcasts along batch/spatial axes.
    o_ref[...] = x_ref[...] * s_ref[...]


def _round_up(x, m):
    return ((x + m - 1) // m) * m


def _sublane_multiple(dtype):
    # Packed sub-32-bit dtypes occupy more sublanes per vreg:
    # f32 -> 8, bf16 -> 16, int8/fp8 -> 32.
    return max(8, 32 // jnp.dtype(dtype).itemsize)


def _pick_block(dim, budget, multiple):
    """Block size for one axis: the full `dim`, or a multiple of `multiple`
    no larger than `budget` (falling back to `dim` if that would exceed it)."""
    if dim <= budget:
        return dim
    blk = (budget // multiple) * multiple
    if blk < multiple:
        blk = multiple
    return dim if blk >= dim else blk


@functools.lru_cache(maxsize=None)
def _chip_kind():
    try:
        return jax.devices()[0].device_kind.lower()
    except Exception:
        return ""


def _target_block_bytes():
    # v6e/v7x: faster HBM + 32 MiB default scoped VMEM -> 4 MiB blocks.
    # v5e (16 MiB default scoped VMEM): stay at 2 MiB blocks.
    kind = _chip_kind()
    if "v6" in kind or "v7" in kind:
        return 4 * 1024 * 1024
    return 2 * 1024 * 1024


def _is_v7x():
    return "v7" in _chip_kind()


# Safe everywhere: v5e/v6e have 128 MiB physical VMEM, v7x defaults to
# 32-of-64 MiB anyway.  Gives v5e headroom above its 16 MiB default.
_VMEM_LIMIT = 32 * 1024 * 1024


def _run_2d(x2, scale_1d):
    """out[n, c] = x2[n, c] * scale_1d[c]  (also used by the flattened 4D path)."""
    N, C = x2.shape
    dtype = x2.dtype
    itemsize = jnp.dtype(dtype).itemsize
    sub = _sublane_multiple(dtype)
    target_elems = max(1, _target_block_bytes() // itemsize)

    # Lanes first (lane-dense stores are the big lever).  Cap tc so the
    # sublane-padded (1, tc) scale block costs <= ~1/4 of the x-block budget.
    tc_cap = max(128, ((target_elems // (4 * sub)) // 128) * 128)
    tc = _pick_block(C, tc_cap, 128)
    tc_pad = _round_up(tc, 128)
    # Rows fill the remaining (padding-aware) budget in sublane multiples.
    tm_budget = max(sub, ((target_elems // tc_pad) // sub) * sub)
    tm = _pick_block(N, tm_budget, sub)

    # v7x only (2 TensorCores): expose >= 2 grid steps, split as evenly as possible.
    if _is_v7x() and pl.cdiv(N, tm) * pl.cdiv(C, tc) < 2:
        if N >= 2 * sub:
            tm = _round_up((N + 1) // 2, sub)
        elif C >= 256:
            tc = _round_up((C + 1) // 2, 128)

    # Column-blocks outermost so the scale block is re-fetched only C/tc times.
    grid = (pl.cdiv(C, tc), pl.cdiv(N, tm))
    return pl.pallas_call(
        _scale_kernel,
        out_shape=jax.ShapeDtypeStruct((N, C), dtype),
        grid=grid,
        in_specs=[
            pl.BlockSpec((tm, tc), lambda j, i: (i, j)),
            pl.BlockSpec((1, tc), lambda j, i: (0, j)),
        ],
        out_specs=pl.BlockSpec((tm, tc), lambda j, i: (i, j)),
        compiler_params=pltpu.CompilerParams(
            dimension_semantics=("parallel", "parallel"),
            vmem_limit_bytes=_VMEM_LIMIT),
    )(x2, scale_1d.reshape(1, C))


def _run_3d(x3, scale_1d):
    """out[n, c, s] = x3[n, c, s] * scale_1d[c].  Requires HW % 128 == 0, C >= sub."""
    N, C, HW = x3.shape
    dtype = x3.dtype
    itemsize = jnp.dtype(dtype).itemsize
    sub = _sublane_multiple(dtype)
    target_elems = max(1, _target_block_bytes() // itemsize)

    # Grow lanes (spatial) first, then batch, then channels, so the
    # lane-padded (1, tc, 1) scale block (tc_pad x 128 words) stays small.
    thw = _pick_block(HW, 8192, 128)          # already 128-aligned here
    bn = min(N, max(1, target_elems // (sub * thw)))
    tc_budget = max(sub, (min(target_elems // (bn * thw),
                              target_elems // 512) // sub) * sub)
    tc = _pick_block(C, tc_budget, sub)

    # v7x only: expose >= 2 grid steps for the two TensorCores.
    if (_is_v7x()
            and pl.cdiv(N, bn) * pl.cdiv(C, tc) * pl.cdiv(HW, thw) < 2):
        if N >= 2:
            bn = (N + 1) // 2
        elif HW >= 256:
            thw = _round_up((HW + 1) // 2, 128)

    # Channel-blocks outermost: scale block index changes only C/tc times.
    grid = (pl.cdiv(C, tc), pl.cdiv(N, bn), pl.cdiv(HW, thw))
    return pl.pallas_call(
        _scale_kernel,
        out_shape=jax.ShapeDtypeStruct((N, C, HW), dtype),
        grid=grid,
        in_specs=[
            pl.BlockSpec((bn, tc, thw), lambda c, n, h: (n, c, h)),
            pl.BlockSpec((1, tc, 1), lambda c, n, h: (0, c, 0)),
        ],
        out_specs=pl.BlockSpec((bn, tc, thw), lambda c, n, h: (n, c, h)),
        compiler_params=pltpu.CompilerParams(
            dimension_semantics=("parallel", "parallel", "parallel"),
            vmem_limit_bytes=_VMEM_LIMIT),
    )(x3, scale_1d.reshape(1, C, 1))


def channel_importance_measure(x, scale):
    """Forward pass of Channel_Importance_Measure.

    x: (N, C, H, W) or (N, C); scale: (C,)
    """
    # Note: PyTorch would promote a bf16/f16 x against the f32 parameter to
    # f32; here we keep x.dtype (identical for the common float32 case).
    scale = scale.astype(x.dtype)

    if x.ndim == 4:
        N, C, H, W = x.shape
        HW = H * W
        sub = _sublane_multiple(x.dtype)
        if HW % 128 == 0 and C >= sub:
            # Lane-dense 3D path; scale stays (C,)-sized, never expanded.
            out3 = _run_3d(x.reshape(N, C, HW), scale)
            return out3.reshape(N, C, H, W)
        # Small C or non-128-aligned HW (e.g. 7x7, 14x14): flatten (C, HW)
        # onto the lane axis so stores are lane-dense and VMEM blocks are not
        # padded.  Expanded scale is only C*HW elements (~1/N of the stream).
        scale_e = jnp.repeat(scale, HW)
        out2 = _run_2d(x.reshape(N, C * HW), scale_e)
        return out2.reshape(N, C, H, W)

    if x.ndim == 2:
        return _run_2d(x, scale)

    raise ValueError(f"expected 2D or 4D input, got shape {x.shape}")


if __name__ == "__main__":
    key = jax.random.PRNGKey(0)
    k4a, k4b, k2, ks = jax.random.split(key, 4)

    def check(x, s):
        y = channel_importance_measure(x, s)
        jax.block_until_ready(y)
        if x.ndim == 4:
            ref = x * s.reshape(1, -1, 1, 1)
        else:
            ref = x * s.reshape(1, -1)
        assert y.shape == x.shape and y.dtype == x.dtype
        assert jnp.allclose(y, ref, atol=1e-6)

    for C in (4, 8):
        # nn.init.constant_(self.scale, 1.0) -> identity; also a random scale
        # to verify the multiply path.
        scale_ones = jnp.ones((C,), dtype=jnp.float32)
        scale_rand = jax.random.normal(ks, (C,), dtype=jnp.float32)

        # 4D, 128-aligned spatial (16x16=256): 3D path for C=8, flattened for C=4.
        x4 = jax.random.normal(k4a, (2, C, 16, 16), dtype=jnp.float32)
        check(x4, scale_ones)
        check(x4, scale_rand)

        # 4D, non-128-aligned spatial (7x7=49): flattened lane-dense path.
        x4u = jax.random.normal(k4b, (2, C, 7, 7), dtype=jnp.float32)
        check(x4u, scale_ones)
        check(x4u, scale_rand)

        # 2D (N, C) path.
        x2 = jax.random.normal(k2, (2, C), dtype=jnp.float32)
        check(x2, scale_ones)
        check(x2, scale_rand)

    print("KERNEL_OK")
</pallas_src>

<mosaic_0001>
module attributes {stable_mosaic.version = 11 : i64} {
  func.func @_scale_kernel(%arg0: i32, %arg1: i32, %arg2: memref<2x1024xf32, #tpu.memory_space<vmem>>, %arg3: memref<1x1024xf32, #tpu.memory_space<vmem>>, %arg4: memref<2x1024xf32, #tpu.memory_space<vmem>>) attributes {dimension_semantics = [#tpu.dimension_semantics<parallel>, #tpu.dimension_semantics<parallel>], iteration_bounds = array<i64: 1, 1>, scalar_prefetch = 0 : i64, scratch_operands = 0 : i64, tpu.core_type = #tpu.core_type<tc>, window_params = [{transform_indices = @transform_0, window_bounds = array<i64: 2, 1024>}, {transform_indices = @transform_1, window_bounds = array<i64: 1, 1024>}, {transform_indices = @transform_2, window_bounds = array<i64: 2, 1024>}]} {
    %c0 = arith.constant 0 : index
    %c0_0 = arith.constant 0 : index
    %0 = vector.load %arg2[%c0, %c0_0] : memref<2x1024xf32, #tpu.memory_space<vmem>>, vector<2x1024xf32>
    %c0_1 = arith.constant 0 : index
    %c0_2 = arith.constant 0 : index
    %1 = vector.load %arg3[%c0_1, %c0_2] : memref<1x1024xf32, #tpu.memory_space<vmem>>, vector<1x1024xf32>
    %2 = vector.broadcast %1 : vector<1x1024xf32> to vector<2x1024xf32>
    %3 = arith.mulf %0, %2 : vector<2x1024xf32>
    %c0_3 = arith.constant 0 : index
    %c0_4 = arith.constant 0 : index
    %4 = vector.load %arg4[%c0_3, %c0_4] : memref<2x1024xf32, #tpu.memory_space<vmem>>, vector<2x1024xf32>
    tpu.vector_store %arg4[%c0_3, %c0_4], %3 {strides = array<i32>} : memref<2x1024xf32, #tpu.memory_space<vmem>>, vector<2x1024xf32>,
    return
  }
  func.func @transform_0(%arg0: i32, %arg1: i32) -> (i32, i32) {
    %c0_i32 = arith.constant 0 : i32
    return %arg1, %arg0 : i32, i32
  }
  func.func @transform_1(%arg0: i32, %arg1: i32) -> (i32, i32) {
    %c0_i32 = arith.constant 0 : i32
    %c0_i32_0 = arith.constant 0 : i32
    return %c0_i32, %arg0 : i32, i32
  }
  func.func @transform_2(%arg0: i32, %arg1: i32) -> (i32, i32) {
    %c0_i32 = arith.constant 0 : i32
    return %arg1, %arg0 : i32, i32
  }
}

</mosaic_0001>

<llo_original>
// kernel: tpu_custom_call.1
$region0: #{tpu_custom_call.1}
  #allocation0 [shape = 'u32[]', space=smem, size = 0x4, offset = 0x4, fixed_abs, tag = 'smem constant byte address 0x4 - core index']
  #allocation1 [shape = 'u32[144,128]{1,0:T(1,128)}', space=vmem, size = 0x12000, scoped, tag = 'internal scratch']
  %s0 = inlined_call_operand.hbm [shape: f32[2,1024], index: 0, kind: input, shape index: {}]
  %s1 = inlined_call_operand.hbm [shape: f32[1,1024], index: 1, kind: input, shape index: {}]
  %s2 = inlined_call_operand.hbm [shape: f32[2,1024], index: 2, kind: output, shape index: {}]
  %s3 = sld [smem:[#allocation0]]
  $region26: #{tpu_custom_call.1} parent=0
    _
  %s5 = ssub.s32 1, %s3
  %s6 = scalar_select 0, %s5, %s3
  $region1: #{tpu_custom_call.1} parent=0
    #allocation2 [shape = 'u8[8192]{0}', space=vmem, size = 0x2000, scoped, tag = 'input window, operand 0, single buffered']
    #allocation3 [shape = 's32[1]{0}', space=sflag, size = 0x4, scoped, tag = 'scoped memory for tpu_custom_call.1']
    #allocation4 [shape = 's32[1]{0}', space=sflag, size = 0x4, scoped, tag = 'scoped memory for tpu_custom_call.1']
    #allocation5 [shape = 'u8[4096]{0}', space=vmem, size = 0x1000, scoped, tag = 'input window, operand 1, single buffered']
    #allocation6 [shape = 's32[1]{0}', space=sflag, size = 0x4, scoped, tag = 'scoped memory for tpu_custom_call.1']
    #allocation7 [shape = 'u8[8192]{0}', space=vmem, size = 0x2000, scoped, tag = 'output window, operand 0, single buffered']
    %7 = vsyncpa [#allocation3], 0
    %8 = vsyncpa [#allocation6], 0
    %9 = vsyncpa [#allocation4], 0
    // Predicated region
    $region2: #{tpu_custom_call.1} parent=1 // pred_check
      _
    $region3: #{tpu_custom_call.1} parent=1 // pred_check_branch
      %11 = sbr.rel (0) target = $region5
    $region4: #{tpu_custom_call.1} parent=1 // pred_region
      %s13 = ssub.s32 256, 256
      %14 = vsyncadd [#allocation3], %s13
      %s16 = sshll.u32 [#allocation2], 4
      %s17 = int_to_ptr.vmem [resolvable:$true] %s16
      %19 = dma.hbm_to_vmem [thread:$0]  %s0, 256, %s17, [#allocation3]
    $region5: #{tpu_custom_call.1} parent=1 // pred_fallthru
      _
    // Predicated region
    $region6: #{tpu_custom_call.1} parent=1 // pred_check
      _
    $region7: #{tpu_custom_call.1} parent=1 // pred_check_branch
      %21 = sbr.rel (0) target = $region9
    $region8: #{tpu_custom_call.1} parent=1 // pred_region
      %s23 = ssub.s32 128, 128
      %24 = vsyncadd [#allocation6], %s23
      %s26 = sshll.u32 [#allocation5], 4
      %s27 = int_to_ptr.vmem [resolvable:$true] %s26
      %29 = dma.hbm_to_vmem [thread:$0]  %s1, 128, %s27, [#allocation6]
    $region9: #{tpu_custom_call.1} parent=1 // pred_fallthru
      _
    // Predicated region
    $region10: #{tpu_custom_call.1} parent=1 // pred_check
      _
    $region11: #{tpu_custom_call.1} parent=1 // pred_check_branch
      %31 = sbr.rel (0) target = $region13
    $region12: #{tpu_custom_call.1} parent=1 // pred_region
      %32 = dma.done [#allocation3], 256
    $region13: #{tpu_custom_call.1} parent=1 // pred_fallthru
      _
    // Predicated region
    $region14: #{tpu_custom_call.1} parent=1 // pred_check
      _
    $region15: #{tpu_custom_call.1} parent=1 // pred_check_branch
      %34 = sbr.rel (0) target = $region17
    $region16: #{tpu_custom_call.1} parent=1 // pred_region
      %35 = dma.done [#allocation6], 128
    $region17: #{tpu_custom_call.1} parent=1 // pred_fallthru
      _
    %v36 = vld [vmem:[#allocation2] sm:$0xff]
    %v37 = vld [vmem:[#allocation2 + $0x8] sm:$0xff]
    %v38 = vld [vmem:[#allocation5] sm:$0xff]
    %v40 = vlaneseq
    %v41 = vshrl.u32 %v40, 7
    %v42 = vsub.s32 0, %v41
    %v43 = vrot.slane %v38, %v42
    %v44 = vlaneseq
    %v45 = vshrl.u32 %v44, 7
    %v46 = vsub.s32 1, %v45
    %v47 = vrot.slane %v38, %v46
    %v48 = vlaneseq
    %v49 = vshrl.u32 %v48, 7
    %v50 = vsub.s32 2, %v49
    %v51 = vrot.slane %v38, %v50
    %v52 = vlaneseq
    %v53 = vshrl.u32 %v52, 7
    %v54 = vsub.s32 3, %v53
    %v55 = vrot.slane %v38, %v54
    %v56 = vlaneseq
    %v57 = vshrl.u32 %v56, 7
    %v58 = vsub.s32 4, %v57
    %v59 = vrot.slane %v38, %v58
    %v60 = vlaneseq
    %v61 = vshrl.u32 %v60, 7
    %v62 = vsub.s32 5, %v61
    %v63 = vrot.slane %v38, %v62
    %v64 = vlaneseq
    %v65 = vshrl.u32 %v64, 7
    %v66 = vsub.s32 6, %v65
    %v67 = vrot.slane %v38, %v66
    %v68 = vlaneseq
    %v69 = vshrl.u32 %v68, 7
    %v70 = vsub.s32 7, %v69
    %v71 = vrot.slane %v38, %v70
    %v72 = vcombine.low %v43, %v47
    %v73 = vcombine.low %v51, %v55
    %v75 = vunpack.c.l.s4 1983009808
    %v76 = vunpack.c.0.s8 %v75
    %v77 = vlaneseq
    %v78 = vshrl.u32 %v77, 7
    %v79 = vsub.s32 %v76, %v78
    %v80 = vrot.slane %v72, %v79
    %v82 = vunpack.c.l.s4 1983009808
    %v83 = vunpack.c.0.s8 %v82
    %v84 = vlaneseq
    %v85 = vshrl.u32 %v84, 7
    %v86 = vsub.s32 %v83, %v85
    %v87 = vrot.slane %v73, %v86
    %v88 = vcombine.low %v80, %v87
    %v89 = vcombine.low %v59, %v63
    %v90 = vcombine.low %v67, %v71
    %v92 = vunpack.c.l.s4 1983009808
    %v93 = vunpack.c.0.s8 %v92
    %v94 = vlaneseq
    %v95 = vshrl.u32 %v94, 7
    %v96 = vsub.s32 %v93, %v95
    %v97 = vrot.slane %v89, %v96
    %v99 = vunpack.c.l.s4 1983009808
    %v100 = vunpack.c.0.s8 %v99
    %v101 = vlaneseq
    %v102 = vshrl.u32 %v101, 7
    %v103 = vsub.s32 %v100, %v102
    %v104 = vrot.slane %v90, %v103
    %v105 = vcombine.low %v97, %v104
    %v108 = vmul.f32 %v36, %v88
    %v109 = vmul.f32 %v37, %v105
    %110 = vst [vmem:[#allocation7] sm:$0xff] %v108
    %111 = vst [vmem:[#allocation7 + $0x8] sm:$0xff] %v109
    // Predicated region
    $region18: #{tpu_custom_call.1} parent=1 // pred_check
      _
    $region19: #{tpu_custom_call.1} parent=1 // pred_check_branch
      %113 = sbr.rel (0) target = $region21
    $region20: #{tpu_custom_call.1} parent=1 // pred_region
      %s115 = ssub.s32 256, 256
      %116 = vsyncadd [#allocation4], %s115
      %s118 = sshll.u32 [#allocation7], 4
      %s119 = int_to_ptr.vmem [resolvable:$true] %s118
      %121 = dma.vmem_to_hbm [thread:$0]  %s119, 256, %s2, [#allocation4]
    $region21: #{tpu_custom_call.1} parent=1 // pred_fallthru
      _
    // Predicated region
    $region22: #{tpu_custom_call.1} parent=1 // pred_check
      _
    $region23: #{tpu_custom_call.1} parent=1 // pred_check_branch
      %123 = sbr.rel (0) target = $region25
    $region24: #{tpu_custom_call.1} parent=1 // pred_region
      %124 = dma.done [#allocation4], 256
    $region25: #{tpu_custom_call.1} parent=1 // pred_fallthru
      _
    %125 = vsyncpa [#allocation3], 1
    %126 = vsyncpa [#allocation6], 1
    %127 = vsyncpa [#allocation4], 1

</llo_original>
